<compile_context>
chip_gen: v5e
topology: v5e:2x2
jax: 0.10.0
libtpu: 0.0.40
codegen_flags: <defaults>
</compile_context>

<pallas_src>
import functools

import jax
import jax.numpy as jnp
from jax.experimental import pallas as pl
from jax.experimental.pallas import tpu as pltpu


def _fold_to_8_sublanes(v, ts):
    """Sum groups of 8 sublanes: (..., ts, 128) -> (..., 8, 128). Pure VPU adds."""
    acc = v[..., 0:8, :]
    for b in range(1, ts // 8):
        acc = acc + v[..., 8 * b:8 * (b + 1), :]
    return acc


def _semantic_losses_kernel(x_ref, y_ref, inter_ref, union_ref, fsum_ref, *, gamma):
    t = pl.program_id(1)

    logits = x_ref[...].astype(jnp.float32)    # (C, TS, 128)
    labels = y_ref[...]                        # (1, TS, 128) int32
    C, TS, _ = logits.shape

    # one-hot over the class axis + validity mask for padded pixels (label == -1)
    cls_idx = jax.lax.broadcasted_iota(jnp.int32, logits.shape, 0)
    onehot = (cls_idx == labels).astype(jnp.float32)           # (C, TS, 128)
    valid = (labels >= 0).astype(jnp.float32)                  # (1, TS, 128)

    # softmax / log-sum-exp over the class axis: VPU ops across C packed vregs
    m = jnp.max(logits, axis=0, keepdims=True)                 # (1, TS, 128)
    ex = jnp.exp(logits - m)                                   # (C, TS, 128) EUP
    se = jnp.sum(ex, axis=0, keepdims=True)                    # (1, TS, 128)
    inv_se = pl.reciprocal(se)        # exact; one reciprocal instead of C divides
    p = ex * inv_se                                            # softmax probs
    lse = jnp.log(se) + m                                      # logsumexp

    # cross entropy per pixel + focal modulation (gamma==2 -> pure VPU multiplies)
    p_true = p * onehot
    true_logit = jnp.sum(logits * onehot, axis=0, keepdims=True)
    ce = lse - true_logit                                      # (1, TS, 128)
    pt = jnp.sum(p_true, axis=0, keepdims=True)                # == exp(-ce)
    om = jnp.maximum(1.0 - pt, 0.0)                            # clamp fp noise
    mod = om * om if gamma == 2.0 else om ** gamma
    focal_px = mod * ce * valid                                # (1, TS, 128)

    # dice partial stats for this tile (p^2 masked on padded pixels; onehot is 0 there)
    union_px = (p * p) * valid + onehot                        # (C, TS, 128)

    focal_part = _fold_to_8_sublanes(focal_px, TS)             # (1, 8, 128)
    inter_part = _fold_to_8_sublanes(p_true, TS)               # (C, 8, 128)
    union_part = _fold_to_8_sublanes(union_px, TS)             # (C, 8, 128)

    @pl.when(t == 0)
    def _():
        inter_ref[...] = jnp.zeros_like(inter_ref)
        union_ref[...] = jnp.zeros_like(union_ref)
        fsum_ref[...] = jnp.zeros_like(fsum_ref)

    inter_ref[...] += inter_part
    union_ref[...] += union_part
    fsum_ref[...] += focal_part


def _choose_tile_rows(R0, C, x_itemsize):
    """Pick TS (sublane rows per spatial tile, multiple of 8) and n_t."""
    row_bytes = 128 * (C * x_itemsize + 4)      # logits planes + int32 labels per row
    budget = 12 << 20                           # per in-flight tile; double-buffered ~24 MiB
    try:
        budget = min(budget, pltpu.get_tpu_info().vmem_capacity_bytes // 5)
    except Exception:
        pass
    max_ts = max(8, min(512, (budget // row_bytes) // 8 * 8))
    r8 = (R0 + 7) // 8 * 8
    if r8 <= max_ts:
        return r8, 1
    # prefer a tile count that exactly divides the 8-row-padded extent (no extra pad)
    for ts in range(max_ts, max_ts // 2 - 1, -8):
        if r8 % ts == 0:
            return ts, r8 // ts
    return max_ts, pl.cdiv(R0, max_ts)


def semantic_losses(x, y, *, alpha=1.0, gamma=2.0, lambdas=(0.5, 0.5),
                    smooth=1e-6, dice_gain=0.85, logits_dtype=None):
    """x: logits [N, C, H, W]; y: labels [N, H, W] int.

    Returns lambda1*focal + lambda2*0.85*(1 - mean(dice[1])) — the weight=None
    path of the PyTorch module (alpha is a no-op multiplier of 1).
    Set logits_dtype=jnp.bfloat16 to halve HBM traffic on memory-bound chips
    (v5e); in-kernel accumulation stays float32.
    """
    N, C, H, W = x.shape
    HW = H * W
    in_dtype = jnp.float32 if logits_dtype is None else logits_dtype
    itemsize = jnp.dtype(in_dtype).itemsize

    R0 = pl.cdiv(HW, 128)
    TS, n_t = _choose_tile_rows(R0, C, itemsize)
    R_pad = TS * n_t
    HW_pad = R_pad * 128

    xr = jnp.reshape(x, (N, C, HW)).astype(in_dtype)
    yr = jnp.reshape(y, (N, HW)).astype(jnp.int32)
    if HW_pad > HW:
        pad = HW_pad - HW
        xr = jnp.pad(xr, ((0, 0), (0, 0), (0, pad)))
        yr = jnp.pad(yr, ((0, 0), (0, pad)), constant_values=-1)   # masked in-kernel
    xr = xr.reshape(N, C, R_pad, 128)
    yr = yr.reshape(N, 1, R_pad, 128)

    kernel = functools.partial(_semantic_losses_kernel, gamma=float(gamma))

    # VMEM budget: double-buffered input tiles + tiny lane-dense outputs + slack.
    tile_bytes = TS * 128 * (C * itemsize + 4)
    out_bytes = (2 * C + 1) * 8 * 128 * 4
    vmem_need = 2 * tile_bytes + 2 * out_bytes + (4 << 20)
    try:
        cap = pltpu.get_tpu_info().vmem_capacity_bytes
    except Exception:
        cap = 64 << 20                       # conservative: v7x physical VMEM
    vmem_limit = int(min(cap - (8 << 20), max(vmem_need, 16 << 20)))

    inter, union, fsum = pl.pallas_call(
        kernel,
        out_shape=(
            jax.ShapeDtypeStruct((N, C, 8, 128), jnp.float32),   # dice intersection partials
            jax.ShapeDtypeStruct((N, C, 8, 128), jnp.float32),   # dice union partials
            jax.ShapeDtypeStruct((N, 1, 8, 128), jnp.float32),   # focal-sum partials
        ),
        grid_spec=pltpu.PrefetchScalarGridSpec(
            num_scalar_prefetch=0,
            grid=(N, n_t),
            in_specs=[
                pl.BlockSpec((pl.Squeezed(), C, TS, 128), lambda n, t: (n, 0, t, 0)),
                pl.BlockSpec((pl.Squeezed(), 1, TS, 128), lambda n, t: (n, 0, t, 0)),
            ],
            out_specs=[
                pl.BlockSpec((pl.Squeezed(), C, 8, 128), lambda n, t: (n, 0, 0, 0)),
                pl.BlockSpec((pl.Squeezed(), C, 8, 128), lambda n, t: (n, 0, 0, 0)),
                pl.BlockSpec((pl.Squeezed(), 1, 8, 128), lambda n, t: (n, 0, 0, 0)),
            ],
        ),
        compiler_params=pltpu.CompilerParams(
            dimension_semantics=("parallel", "arbitrary"),
            vmem_limit_bytes=vmem_limit),
    )(xr, yr)

    # --- glue: trivial scalar combination, matches the PyTorch module (weight=None) ---
    focal = (jnp.sum(fsum) / (N * HW)) * float(alpha)          # mean focal, gain=1
    inter_nc = jnp.sum(inter, axis=(2, 3))                     # (N, C)
    union_nc = jnp.sum(union, axis=(2, 3))                     # (N, C)
    dice = (2.0 * inter_nc + smooth) / (union_nc + smooth)
    # TODO(synk): dice[1] hard-requires N >= 2, exactly like the original module.
    dice_loss = dice_gain * (1.0 - jnp.mean(dice[1]))
    return lambdas[0] * focal + lambdas[1] * dice_loss


def _reference(x, y, *, gamma=2.0, lambdas=(0.5, 0.5), smooth=1e-6, dice_gain=0.85):
    """Pure-JAX reference mirroring the PyTorch forward (weight=None path)."""
    N, C, H, W = x.shape
    logp = jax.nn.log_softmax(x, axis=1)
    onehot = jax.nn.one_hot(y, C, axis=1)                      # (N, C, H, W)
    ce = -jnp.sum(logp * onehot, axis=1)                       # (N, H, W)
    pt = jnp.exp(-ce)
    focal = jnp.mean(((1.0 - pt) ** gamma) * ce)
    p = jax.nn.softmax(x, axis=1).reshape(N, C, -1)
    oh = onehot.reshape(N, C, -1)
    inter = jnp.sum(p * oh, axis=2)
    union = jnp.sum(p * p, axis=2) + jnp.sum(oh, axis=2)
    dice = (2.0 * inter + smooth) / (union + smooth)
    dice_loss = dice_gain * (1.0 - jnp.mean(dice[1]))
    return lambdas[0] * focal + lambdas[1] * dice_loss


if __name__ == "__main__":
    key = jax.random.PRNGKey(0)
    kx, ky = jax.random.split(key)
    N, C, H, W = 2, 4, 16, 16
    x = jax.random.normal(kx, (N, C, H, W), dtype=jnp.float32)
    y = jax.random.randint(ky, (N, H, W), 0, C, dtype=jnp.int32)

    loss = jax.block_until_ready(semantic_losses(x, y))
    ref = jax.block_until_ready(_reference(x, y))

    assert jnp.isfinite(loss), "loss contains NaN or Inf!"
    assert jnp.allclose(loss, ref, rtol=1e-5, atol=1e-5), (loss, ref)
    print("KERNEL_OK")
</pallas_src>

<mosaic_0001>
module attributes {stable_mosaic.version = 11 : i64} {
  func.func @_semantic_losses_kernel(%arg0: i32, %arg1: i32, %arg2: memref<1x4x8x128xf32, #tpu.memory_space<vmem>>, %arg3: memref<1x1x8x128xi32, #tpu.memory_space<vmem>>, %arg4: memref<1x4x8x128xf32, #tpu.memory_space<vmem>>, %arg5: memref<1x4x8x128xf32, #tpu.memory_space<vmem>>, %arg6: memref<1x1x8x128xf32, #tpu.memory_space<vmem>>) attributes {dimension_semantics = [#tpu.dimension_semantics<parallel>, #tpu.dimension_semantics<arbitrary>], iteration_bounds = array<i64: 2, 1>, scalar_prefetch = 0 : i64, scratch_operands = 0 : i64, tpu.core_type = #tpu.core_type<tc>, window_params = [{transform_indices = @transform_0, window_bounds = array<i64: 1, 4, 8, 128>}, {transform_indices = @transform_1, window_bounds = array<i64: 1, 1, 8, 128>}, {transform_indices = @transform_2, window_bounds = array<i64: 1, 4, 8, 128>}, {transform_indices = @transform_3, window_bounds = array<i64: 1, 4, 8, 128>}, {transform_indices = @transform_4, window_bounds = array<i64: 1, 1, 8, 128>}]} {
    %c0 = arith.constant 0 : index
    %c0_0 = arith.constant 0 : index
    %c0_1 = arith.constant 0 : index
    %c0_2 = arith.constant 0 : index
    %0 = vector.load %arg2[%c0, %c0_0, %c0_1, %c0_2] : memref<1x4x8x128xf32, #tpu.memory_space<vmem>>, vector<1x4x8x128xf32>
    %1 = vector.shape_cast %0 : vector<1x4x8x128xf32> to vector<4x8x128xf32>
    %c0_3 = arith.constant 0 : index
    %c0_4 = arith.constant 0 : index
    %c0_5 = arith.constant 0 : index
    %c0_6 = arith.constant 0 : index
    %2 = vector.load %arg3[%c0_3, %c0_4, %c0_5, %c0_6] : memref<1x1x8x128xi32, #tpu.memory_space<vmem>>, vector<1x1x8x128xi32>
    %3 = vector.shape_cast %2 : vector<1x1x8x128xi32> to vector<1x8x128xi32>
    %4 = tpu.iota {dimensions = array<i32: 0>} : vector<4x8x128xi32>
    %5 = vector.broadcast %3 : vector<1x8x128xi32> to vector<4x8x128xi32>
    %6 = arith.cmpi eq, %4, %5 : vector<4x8x128xi32>
    %7 = arith.extui %6 : vector<4x8x128xi1> to vector<4x8x128xi32>
    %8 = arith.sitofp %7 : vector<4x8x128xi32> to vector<4x8x128xf32>
    %c0_i32 = arith.constant 0 : i32
    %9 = vector.broadcast %c0_i32 : i32 to vector<1x8x128xi32>
    %10 = arith.cmpi sge, %3, %9 : vector<1x8x128xi32>
    %11 = arith.extui %10 : vector<1x8x128xi1> to vector<1x8x128xi32>
    %12 = arith.sitofp %11 : vector<1x8x128xi32> to vector<1x8x128xf32>
    %cst = arith.constant dense<0xFF800000> : vector<8x128xf32>
    %13 = vector.multi_reduction <maximumf>, %1, %cst [0] : vector<4x8x128xf32> to vector<8x128xf32>
    %14 = vector.shape_cast %13 : vector<8x128xf32> to vector<1x8x128xf32>
    %15 = vector.broadcast %14 : vector<1x8x128xf32> to vector<4x8x128xf32>
    %16 = arith.subf %1, %15 : vector<4x8x128xf32>
    %17 = math.exp %16 : vector<4x8x128xf32>
    %cst_7 = arith.constant dense<0.000000e+00> : vector<8x128xf32>
    %18 = vector.multi_reduction <add>, %17, %cst_7 [0] : vector<4x8x128xf32> to vector<8x128xf32>
    %19 = vector.shape_cast %18 : vector<8x128xf32> to vector<1x8x128xf32>
    %20 = tpu.reciprocal %19 : vector<1x8x128xf32> -> vector<1x8x128xf32>
    %21 = vector.broadcast %20 : vector<1x8x128xf32> to vector<4x8x128xf32>
    %22 = arith.mulf %17, %21 : vector<4x8x128xf32>
    %23 = math.log %19 : vector<1x8x128xf32>
    %24 = arith.addf %23, %14 : vector<1x8x128xf32>
    %25 = arith.mulf %22, %8 : vector<4x8x128xf32>
    %26 = arith.mulf %1, %8 : vector<4x8x128xf32>
    %cst_8 = arith.constant dense<0.000000e+00> : vector<8x128xf32>
    %27 = vector.multi_reduction <add>, %26, %cst_8 [0] : vector<4x8x128xf32> to vector<8x128xf32>
    %28 = vector.shape_cast %27 : vector<8x128xf32> to vector<1x8x128xf32>
    %29 = arith.subf %24, %28 : vector<1x8x128xf32>
    %cst_9 = arith.constant dense<0.000000e+00> : vector<8x128xf32>
    %30 = vector.multi_reduction <add>, %25, %cst_9 [0] : vector<4x8x128xf32> to vector<8x128xf32>
    %31 = vector.shape_cast %30 : vector<8x128xf32> to vector<1x8x128xf32>
    %cst_10 = arith.constant 1.000000e+00 : f32
    %32 = vector.broadcast %cst_10 : f32 to vector<1x8x128xf32>
    %33 = arith.subf %32, %31 : vector<1x8x128xf32>
    %cst_11 = arith.constant 0.000000e+00 : f32
    %34 = vector.broadcast %cst_11 : f32 to vector<1x8x128xf32>
    %35 = arith.maximumf %33, %34 : vector<1x8x128xf32>
    %36 = arith.mulf %35, %35 : vector<1x8x128xf32>
    %37 = arith.mulf %36, %29 : vector<1x8x128xf32>
    %38 = arith.mulf %37, %12 : vector<1x8x128xf32>
    %39 = arith.mulf %22, %22 : vector<4x8x128xf32>
    %40 = vector.broadcast %12 : vector<1x8x128xf32> to vector<4x8x128xf32>
    %41 = arith.mulf %39, %40 : vector<4x8x128xf32>
    %42 = arith.addf %41, %8 : vector<4x8x128xf32>
    %c0_i32_12 = arith.constant 0 : i32
    %43 = arith.cmpi eq, %arg1, %c0_i32_12 : i32
    %44 = arith.extui %43 : i1 to i32
    %c0_i32_13 = arith.constant 0 : i32
    %45 = arith.cmpi ne, %44, %c0_i32_13 : i32
    scf.if %45 {
      %cst_38 = arith.constant 0.000000e+00 : f32
      %64 = vector.broadcast %cst_38 : f32 to vector<4x8x128xf32>
      %c0_39 = arith.constant 0 : index
      %c0_40 = arith.constant 0 : index
      %c0_41 = arith.constant 0 : index
      %c0_42 = arith.constant 0 : index
      %65 = vector.load %arg4[%c0_39, %c0_40, %c0_41, %c0_42] : memref<1x4x8x128xf32, #tpu.memory_space<vmem>>, vector<1x4x8x128xf32>
      %66 = vector.shape_cast %65 : vector<1x4x8x128xf32> to vector<4x8x128xf32>
      %67 = vector.shape_cast %64 : vector<4x8x128xf32> to vector<1x4x8x128xf32>
      tpu.vector_store %arg4[%c0_39, %c0_40, %c0_41, %c0_42], %67 {strides = array<i32>} : memref<1x4x8x128xf32, #tpu.memory_space<vmem>>, vector<1x4x8x128xf32>,
      %cst_43 = arith.constant 0.000000e+00 : f32
      %68 = vector.broadcast %cst_43 : f32 to vector<4x8x128xf32>
      %c0_44 = arith.constant 0 : index
      %c0_45 = arith.constant 0 : index
      %c0_46 = arith.constant 0 : index
      %c0_47 = arith.constant 0 : index
      %69 = vector.load %arg5[%c0_44, %c0_45, %c0_46, %c0_47] : memref<1x4x8x128xf32, #tpu.memory_space<vmem>>, vector<1x4x8x128xf32>
      %70 = vector.shape_cast %69 : vector<1x4x8x128xf32> to vector<4x8x128xf32>
      %71 = vector.shape_cast %68 : vector<4x8x128xf32> to vector<1x4x8x128xf32>
      tpu.vector_store %arg5[%c0_44, %c0_45, %c0_46, %c0_47], %71 {strides = array<i32>} : memref<1x4x8x128xf32, #tpu.memory_space<vmem>>, vector<1x4x8x128xf32>,
      %cst_48 = arith.constant 0.000000e+00 : f32
      %72 = vector.broadcast %cst_48 : f32 to vector<1x8x128xf32>
      %c0_49 = arith.constant 0 : index
      %c0_50 = arith.constant 0 : index
      %c0_51 = arith.constant 0 : index
      %c0_52 = arith.constant 0 : index
      %73 = vector.load %arg6[%c0_49, %c0_50, %c0_51, %c0_52] : memref<1x1x8x128xf32, #tpu.memory_space<vmem>>, vector<1x1x8x128xf32>
      %74 = vector.shape_cast %73 : vector<1x1x8x128xf32> to vector<1x8x128xf32>
      %75 = vector.shape_cast %72 : vector<1x8x128xf32> to vector<1x1x8x128xf32>
      tpu.vector_store %arg6[%c0_49, %c0_50, %c0_51, %c0_52], %75 {strides = array<i32>} : memref<1x1x8x128xf32, #tpu.memory_space<vmem>>, vector<1x1x8x128xf32>,
    } else {
    }
    %c0_14 = arith.constant 0 : index
    %c0_15 = arith.constant 0 : index
    %c0_16 = arith.constant 0 : index
    %c0_17 = arith.constant 0 : index
    %46 = vector.load %arg4[%c0_14, %c0_15, %c0_16, %c0_17] : memref<1x4x8x128xf32, #tpu.memory_space<vmem>>, vector<1x4x8x128xf32>
    %47 = vector.shape_cast %46 : vector<1x4x8x128xf32> to vector<4x8x128xf32>
    %48 = arith.addf %47, %25 : vector<4x8x128xf32>
    %c0_18 = arith.constant 0 : index
    %c0_19 = arith.constant 0 : index
    %c0_20 = arith.constant 0 : index
    %c0_21 = arith.constant 0 : index
    %49 = vector.load %arg4[%c0_18, %c0_19, %c0_20, %c0_21] : memref<1x4x8x128xf32, #tpu.memory_space<vmem>>, vector<1x4x8x128xf32>
    %50 = vector.shape_cast %49 : vector<1x4x8x128xf32> to vector<4x8x128xf32>
    %51 = vector.shape_cast %48 : vector<4x8x128xf32> to vector<1x4x8x128xf32>
    tpu.vector_store %arg4[%c0_18, %c0_19, %c0_20, %c0_21], %51 {strides = array<i32>} : memref<1x4x8x128xf32, #tpu.memory_space<vmem>>, vector<1x4x8x128xf32>,
    %c0_22 = arith.constant 0 : index
    %c0_23 = arith.constant 0 : index
    %c0_24 = arith.constant 0 : index
    %c0_25 = arith.constant 0 : index
    %52 = vector.load %arg5[%c0_22, %c0_23, %c0_24, %c0_25] : memref<1x4x8x128xf32, #tpu.memory_space<vmem>>, vector<1x4x8x128xf32>
    %53 = vector.shape_cast %52 : vector<1x4x8x128xf32> to vector<4x8x128xf32>
    %54 = arith.addf %53, %42 : vector<4x8x128xf32>
    %c0_26 = arith.constant 0 : index
    %c0_27 = arith.constant 0 : index
    %c0_28 = arith.constant 0 : index
    %c0_29 = arith.constant 0 : index
    %55 = vector.load %arg5[%c0_26, %c0_27, %c0_28, %c0_29] : memref<1x4x8x128xf32, #tpu.memory_space<vmem>>, vector<1x4x8x128xf32>
    %56 = vector.shape_cast %55 : vector<1x4x8x128xf32> to vector<4x8x128xf32>
    %57 = vector.shape_cast %54 : vector<4x8x128xf32> to vector<1x4x8x128xf32>
    tpu.vector_store %arg5[%c0_26, %c0_27, %c0_28, %c0_29], %57 {strides = array<i32>} : memref<1x4x8x128xf32, #tpu.memory_space<vmem>>, vector<1x4x8x128xf32>,
    %c0_30 = arith.constant 0 : index
    %c0_31 = arith.constant 0 : index
    %c0_32 = arith.constant 0 : index
    %c0_33 = arith.constant 0 : index
    %58 = vector.load %arg6[%c0_30, %c0_31, %c0_32, %c0_33] : memref<1x1x8x128xf32, #tpu.memory_space<vmem>>, vector<1x1x8x128xf32>
    %59 = vector.shape_cast %58 : vector<1x1x8x128xf32> to vector<1x8x128xf32>
    %60 = arith.addf %59, %38 : vector<1x8x128xf32>
    %c0_34 = arith.constant 0 : index
    %c0_35 = arith.constant 0 : index
    %c0_36 = arith.constant 0 : index
    %c0_37 = arith.constant 0 : index
    %61 = vector.load %arg6[%c0_34, %c0_35, %c0_36, %c0_37] : memref<1x1x8x128xf32, #tpu.memory_space<vmem>>, vector<1x1x8x128xf32>
    %62 = vector.shape_cast %61 : vector<1x1x8x128xf32> to vector<1x8x128xf32>
    %63 = vector.shape_cast %60 : vector<1x8x128xf32> to vector<1x1x8x128xf32>
    tpu.vector_store %arg6[%c0_34, %c0_35, %c0_36, %c0_37], %63 {strides = array<i32>} : memref<1x1x8x128xf32, #tpu.memory_space<vmem>>, vector<1x1x8x128xf32>,
    return
  }
  func.func @transform_0(%arg0: i32, %arg1: i32) -> (i32, i32, i32, i32) {
    %c0_i32 = arith.constant 0 : i32
    %c0_i32_0 = arith.constant 0 : i32
    %c0_i32_1 = arith.constant 0 : i32
    return %arg0, %c0_i32, %arg1, %c0_i32_0 : i32, i32, i32, i32
  }
  func.func @transform_1(%arg0: i32, %arg1: i32) -> (i32, i32, i32, i32) {
    %c0_i32 = arith.constant 0 : i32
    %c0_i32_0 = arith.constant 0 : i32
    %c0_i32_1 = arith.constant 0 : i32
    return %arg0, %c0_i32, %arg1, %c0_i32_0 : i32, i32, i32, i32
  }
  func.func @transform_2(%arg0: i32, %arg1: i32) -> (i32, i32, i32, i32) {
    %c0_i32 = arith.constant 0 : i32
    %c0_i32_0 = arith.constant 0 : i32
    %c0_i32_1 = arith.constant 0 : i32
    %c0_i32_2 = arith.constant 0 : i32
    return %arg0, %c0_i32, %c0_i32_0, %c0_i32_1 : i32, i32, i32, i32
  }
  func.func @transform_3(%arg0: i32, %arg1: i32) -> (i32, i32, i32, i32) {
    %c0_i32 = arith.constant 0 : i32
    %c0_i32_0 = arith.constant 0 : i32
    %c0_i32_1 = arith.constant 0 : i32
    %c0_i32_2 = arith.constant 0 : i32
    return %arg0, %c0_i32, %c0_i32_0, %c0_i32_1 : i32, i32, i32, i32
  }
  func.func @transform_4(%arg0: i32, %arg1: i32) -> (i32, i32, i32, i32) {
    %c0_i32 = arith.constant 0 : i32
    %c0_i32_0 = arith.constant 0 : i32
    %c0_i32_1 = arith.constant 0 : i32
    %c0_i32_2 = arith.constant 0 : i32
    return %arg0, %c0_i32, %c0_i32_0, %c0_i32_1 : i32, i32, i32, i32
  }
}

</mosaic_0001>

<llo_original>
// kernel: tpu_custom_call.1
$region0: #{tpu_custom_call.1}
  #allocation0 [shape = 'u32[]', space=smem, size = 0x4, offset = 0x4, fixed_abs, tag = 'smem constant byte address 0x4 - core index']
  #allocation1 [shape = 'u32[72,128]{1,0:T(1,128)}', space=vmem, size = 0x9000, scoped, tag = 'internal scratch']
  %s0 = inlined_call_operand.hbm [shape: f32[2,4,8,128], index: 0, kind: input, shape index: {}]
  %s1 = inlined_call_operand.hbm [shape: s32[2,1,8,128], index: 1, kind: input, shape index: {}]
  %s2 = inlined_call_operand.hbm [shape: f32[2,4,8,128], index: 2, kind: output, shape index: {0}]
  %s3 = inlined_call_operand.hbm [shape: f32[2,4,8,128], index: 3, kind: output, shape index: {1}]
  %s4 = inlined_call_operand.hbm [shape: f32[2,1,8,128], index: 4, kind: output, shape index: {2}]
  %5 = xla_tuple %s2, %s3, %s4
  %s6 = sld [smem:[#allocation0]]
  $region69: #{tpu_custom_call.1} parent=0
    _
  %s8 = ssub.s32 1, %s6
  %s9 = scalar_select 0, %s8, %s6
  $region1: #{tpu_custom_call.1} parent=0
    #allocation2 [shape = 'u8[32768]{0}', space=vmem, size = 0x8000, scoped, tag = 'input window, operand 0']
    #allocation3 [shape = 's32[2]{0}', space=sflag, size = 0x8, scoped, tag = 'scoped memory for tpu_custom_call.1']
    #allocation4 [shape = 's32[2]{0}', space=sflag, size = 0x8, scoped, tag = 'scoped memory for tpu_custom_call.1']
    #allocation5 [shape = 'u8[8192]{0}', space=vmem, size = 0x2000, scoped, tag = 'input window, operand 1']
    #allocation6 [shape = 's32[2]{0}', space=sflag, size = 0x8, scoped, tag = 'scoped memory for tpu_custom_call.1']
    #allocation7 [shape = 'u8[32768]{0}', space=vmem, size = 0x8000, scoped, tag = 'output window, operand 0']
    #allocation8 [shape = 'u8[32768]{0}', space=vmem, size = 0x8000, scoped, tag = 'output window, operand 1']
    #allocation9 [shape = 's32[2]{0}', space=sflag, size = 0x8, scoped, tag = 'scoped memory for tpu_custom_call.1']
    #allocation10 [shape = 'u8[8192]{0}', space=vmem, size = 0x2000, scoped, tag = 'output window, operand 2']
    %10 = vsyncpa [#allocation3], 0
    %s11 = scalar_lea.sflag [#allocation3], 1
    %12 = vsyncpa %s11, 0
    %13 = vsyncpa [#allocation6], 0
    %s14 = scalar_lea.sflag [#allocation6], 1
    %15 = vsyncpa %s14, 0
    %16 = vsyncpa [#allocation4], 0
    %s17 = scalar_lea.sflag [#allocation4], 1
    %18 = vsyncpa %s17, 0
    %19 = vsyncpa [#allocation9], 0
    %s20 = scalar_lea.sflag [#allocation9], 1
    %21 = vsyncpa %s20, 0
    loop: start=0, step=1, limit=4
    $region2: #{tpu_custom_call.1} parent=1 // loop_pre_header
      _
    $region3: #{tpu_custom_call.1} parent=1 // loop_header
      %s23 = sphi 0, %s27
      %p24 = scmp.ge.s32.totalorder %s23, 4
      %s30 = sphi 0, %s42
      %s31 = sphi 0, %s38
      %s32 = sphi 0, %s30
      %s33 = sphi 0, %s31
      %s34 = sphi 0, %s32
      %s35 = sphi 0, %s33
      %s47 = sphi 0, %s49
      %s50 = sphi 0, %s47
      %s51 = sphi 0, %s50
      %s67 = sphi 0, %s51
      %s75 = sphi 0, %s77
      %s78 = sphi 0, %s75
      %s79 = sphi 0, %s78
      %s95 = sphi 0, %s79
      %s101 = sphi 0, %s103
      %s104 = sphi 0, %s101
      %s105 = sphi 0, %s104
      %s121 = sphi 0, %s105
      %s127 = sphi 0, %s129
      %s130 = sphi 0, %s127
      %s131 = sphi 0, %s130
      %s147 = sphi 0, %s131
      %s153 = sphi 0, %s155
      %s156 = sphi 0, %s153
      %s157 = sphi 0, %s156
      %s173 = sphi 0, %s157
    $region4: #{tpu_custom_call.1} parent=1 // loop_header_branch
      %26 = sbr.rel (%p24) target = $region8
    $region5: #{tpu_custom_call.1} parent=1 // loop_body
      %s28 = ssub.s32 %s23, 1
      %s29 = ssub.s32 %s23, 2
      %s36 = sadd.s32 1, %s31
      %p37 = scmp.ge.s32.totalorder %s36, 1
      %s38 = scalar_select %p37, 0, %s36
      %s39 = sadd.s32 1, %s30
      %s40 = scalar_select %p37, %s39, %s30
      %p41 = scmp.ge.s32.totalorder %s40, 2
      %s42 = scalar_select %p41, 0, %s40
      %s43 = ssub.s32 %s30, %s42
      %s44 = ssub.s32 %s31, %s38
      %s45 = sor.u32 %s43, %s44
      %p46 = scmp.eq.s32.totalorder %s45, 0
      %s48 = sadd.s32 %s47, 1
      %s49 = scalar_select %p46, %s47, %s48
      %p52 = pneg %p46
      %p53 = scmp.eq.s32.totalorder %s23, 1
      %p54 = por %p52, %p53
      %p55 = scmp.ne.s32.totalorder %s47, %s50
      %p56 = scmp.eq.s32.totalorder %s23, 0
      %p57 = por %p55, %p56
      %p58 = scmp.ne.s32.totalorder %s47, %s50
      %p59 = scmp.eq.s32.totalorder %s28, 1
      %p60 = por %p58, %p59
      %p61 = scmp.ne.s32.totalorder %s50, %s51
      %p62 = scmp.eq.s32.totalorder %s28, 0
      %p63 = por %p61, %p62
      %p64 = scmp.ne.s32.totalorder %s50, %s51
      %p65 = scmp.eq.s32.totalorder %s29, 1
      %p66 = por %p64, %p65
      %p68 = scmp.ne.s32.totalorder %s51, %s67
      %p69 = scmp.eq.s32.totalorder %s29, 0
      %p70 = por %p68, %p69
      %s71 = ssub.s32 %s30, %s42
      %s72 = ssub.s32 %s31, %s38
      %s73 = sor.u32 %s71, %s72
      %p74 = scmp.eq.s32.totalorder %s73, 0
      %s76 = sadd.s32 %s75, 1
      %s77 = scalar_select %p74, %s75, %s76
      %p80 = pneg %p74
      %p81 = scmp.eq.s32.totalorder %s23, 1
      %p82 = por %p80, %p81
      %p83 = scmp.ne.s32.totalorder %s75, %s78
      %p84 = scmp.eq.s32.totalorder %s23, 0
      %p85 = por %p83, %p84
      %p86 = scmp.ne.s32.totalorder %s75, %s78
      %p87 = scmp.eq.s32.totalorder %s28, 1
      %p88 = por %p86, %p87
      %p89 = scmp.ne.s32.totalorder %s78, %s79
      %p90 = scmp.eq.s32.totalorder %s28, 0
      %p91 = por %p89, %p90
      %p92 = scmp.ne.s32.totalorder %s78, %s79
      %p93 = scmp.eq.s32.totalorder %s29, 1
      %p94 = por %p92, %p93
      %p96 = scmp.ne.s32.totalorder %s79, %s95
      %p97 = scmp.eq.s32.totalorder %s29, 0
      %p98 = por %p96, %p97
      %s99 = ssub.s32 %s30, %s42
      %p100 = scmp.eq.s32.totalorder %s99, 0
      %s102 = sadd.s32 %s101, 1
      %s103 = scalar_select %p100, %s101, %s102
      %p106 = pneg %p100
      %p107 = scmp.eq.s32.totalorder %s23, 1
      %p108 = por %p106, %p107
      %p109 = scmp.ne.s32.totalorder %s101, %s104
      %p110 = scmp.eq.s32.totalorder %s23, 0
      %p111 = por %p109, %p110
      %p112 = scmp.ne.s32.totalorder %s101, %s104
      %p113 = scmp.eq.s32.totalorder %s28, 1
      %p114 = por %p112, %p113
      %p115 = scmp.ne.s32.totalorder %s104, %s105
      %p116 = scmp.eq.s32.totalorder %s28, 0
      %p117 = por %p115, %p116
      %p118 = scmp.ne.s32.totalorder %s104, %s105
      %p119 = scmp.eq.s32.totalorder %s29, 1
      %p120 = por %p118, %p119
      %p122 = scmp.ne.s32.totalorder %s105, %s121
      %p123 = scmp.eq.s32.totalorder %s29, 0
      %p124 = por %p122, %p123
      %s125 = ssub.s32 %s30, %s42
      %p126 = scmp.eq.s32.totalorder %s125, 0
      %s128 = sadd.s32 %s127, 1
      %s129 = scalar_select %p126, %s127, %s128
      %p132 = pneg %p126
      %p133 = scmp.eq.s32.totalorder %s23, 1
      %p134 = por %p132, %p133
      %p135 = scmp.ne.s32.totalorder %s127, %s130
      %p136 = scmp.eq.s32.totalorder %s23, 0
      %p137 = por %p135, %p136
      %p138 = scmp.ne.s32.totalorder %s127, %s130
      %p139 = scmp.eq.s32.totalorder %s28, 1
      %p140 = por %p138, %p139
      %p141 = scmp.ne.s32.totalorder %s130, %s131
      %p142 = scmp.eq.s32.totalorder %s28, 0
      %p143 = por %p141, %p142
      %p144 = scmp.ne.s32.totalorder %s130, %s131
      %p145 = scmp.eq.s32.totalorder %s29, 1
      %p146 = por %p144, %p145
      %p148 = scmp.ne.s32.totalorder %s131, %s147
      %p149 = scmp.eq.s32.totalorder %s29, 0
      %p150 = por %p148, %p149
      %s151 = ssub.s32 %s30, %s42
      %p152 = scmp.eq.s32.totalorder %s151, 0
      %s154 = sadd.s32 %s153, 1
      %s155 = scalar_select %p152, %s153, %s154
      %p158 = pneg %p152
      %p159 = scmp.eq.s32.totalorder %s23, 1
      %p160 = por %p158, %p159
      %p161 = scmp.ne.s32.totalorder %s153, %s156
      %p162 = scmp.eq.s32.totalorder %s23, 0
      %p163 = por %p161, %p162
      %p164 = scmp.ne.s32.totalorder %s153, %s156
      %p165 = scmp.eq.s32.totalorder %s28, 1
      %p166 = por %p164, %p165
      %p167 = scmp.ne.s32.totalorder %s156, %s157
      %p168 = scmp.eq.s32.totalorder %s28, 0
      %p169 = por %p167, %p168
      %p170 = scmp.ne.s32.totalorder %s156, %s157
      %p171 = scmp.eq.s32.totalorder %s29, 1
      %p172 = por %p170, %p171
      %p174 = scmp.ne.s32.totalorder %s157, %s173
      %p175 = scmp.eq.s32.totalorder %s29, 0
      %p176 = por %p174, %p175
      %p177 = scmp.le.s32.totalorder 1, %s23
      %p178 = scmp.lt.s32.totalorder %s23, 3
      %p179 = pnand %p177, %p178
      %p180 = pneg %p179
      // Predicated region
      $region9: #{tpu_custom_call.1} parent=5 // pred_check
        _
      $region10: #{tpu_custom_call.1} parent=5 // pred_check_branch
        %182 = sbr.rel (%p179) target = $region12
      $region11: #{tpu_custom_call.1} parent=5 // pred_region
        %s183 = ssub.s32 %s23, 1
      $region12: #{tpu_custom_call.1} parent=5 // pred_fallthru
        _
      %p184 = scmp.lt.s32.totalorder %s23, 2
      // Predicated region
      $region13: #{tpu_custom_call.1} parent=5 // pred_check
        %p185 = pneg %p184
      $region14: #{tpu_custom_call.1} parent=5 // pred_check_branch
        %187 = sbr.rel (%p185) target = $region16
      $region15: #{tpu_custom_call.1} parent=5 // pred_region
        // Predicated region
        $region17: #{tpu_custom_call.1} parent=15 // pred_check
          %p188 = pneg %p57
        $region18: #{tpu_custom_call.1} parent=15 // pred_check_branch
          %190 = sbr.rel (%p188) target = $region20
        $region19: #{tpu_custom_call.1} parent=15 // pred_region
          %s191 = sand.u32 %s47, 1
          %s192 = scalar_lea.sflag [#allocation3], %s191
          %s193 = sand.u32 %s47, 1
          %s194 = smul.addr %s193, 32
          %s195 = scalar_lea.vmem [#allocation2], %s194
          %197 = vsyncadd %s192, 0
          %s198 = smul.addr %s30, 4
          %s199 = sadd.s32 %s31, %s198
          %s200 = smul.addr %s199, 8
          %s201 = scalar_lea.hbm %s0, %s200
          %s202 = sshll.u32 %s201, 4
          %s203 = int_to_ptr.hbm [resolvable:$true] %s202
          %s204 = sshll.u32 %s195, 4
          %s205 = int_to_ptr.vmem [resolvable:$true] %s204
          %210 = dma.hbm_to_vmem [thread:$0]  %s203, 512, %s205, %s192, 128, 128, 8
        $region20: #{tpu_custom_call.1} parent=15 // pred_fallthru
          _
        // Predicated region
        $region21: #{tpu_custom_call.1} parent=15 // pred_check
          %p211 = pneg %p85
        $region22: #{tpu_custom_call.1} parent=15 // pred_check_branch
          %213 = sbr.rel (%p211) target = $region24
        $region23: #{tpu_custom_call.1} parent=15 // pred_region
          %s214 = sand.u32 %s75, 1
          %s215 = scalar_lea.sflag [#allocation6], %s214
          %s216 = sand.u32 %s75, 1
          %s217 = smul.addr %s216, 8
          %s218 = scalar_lea.vmem [#allocation5], %s217
          %220 = vsyncadd %s215, 0
          %s221 = sadd.s32 %s31, %s30
          %s222 = smul.addr %s221, 8
          %s223 = scalar_lea.hbm %s1, %s222
          %s225 = sshll.u32 %s223, 4
          %s226 = int_to_ptr.hbm [resolvable:$true] %s225
          %s227 = sshll.u32 %s218, 4
          %s228 = int_to_ptr.vmem [resolvable:$true] %s227
          %230 = dma.hbm_to_vmem [thread:$0]  %s226, 128, %s228, %s215
        $region24: #{tpu_custom_call.1} parent=15 // pred_fallthru
          _
      $region16: #{tpu_custom_call.1} parent=5 // pred_fallthru
        _
      %p231 = scmp.le.s32.totalorder 1, %s23
      %p232 = scmp.lt.s32.totalorder %s23, 3
      %p233 = pnand %p231, %p232
      %p234 = pneg %p233
      // Predicated region
      $region25: #{tpu_custom_call.1} parent=5 // pred_check
        _
      $region26: #{tpu_custom_call.1} parent=5 // pred_check_branch
        %236 = sbr.rel (%p233) target = $region28
      $region27: #{tpu_custom_call.1} parent=5 // pred_region
        %s237 = ssub.s32 %s23, 1
        %s238 = sand.u32 %s50, 1
        %s239 = scalar_lea.sflag [#allocation3], %s238
        %s240 = sand.u32 %s50, 1
        %s241 = smul.addr %s240, 32
        %s242 = scalar_lea.vmem [#allocation2], %s241
        // Predicated region
        $region29: #{tpu_custom_call.1} parent=27 // pred_check
          %p243 = pneg %p63
        $region30: #{tpu_custom_call.1} parent=27 // pred_check_branch
          %245 = sbr.rel (%p243) target = $region32
        $region31: #{tpu_custom_call.1} parent=27 // pred_region
          %247 = dma.done %s239, 512
        $region32: #{tpu_custom_call.1} parent=27 // pred_fallthru
          _
        %s248 = sand.u32 %s78, 1
        %s249 = scalar_lea.sflag [#allocation6], %s248
        %s250 = sand.u32 %s78, 1
        %s251 = smul.addr %s250, 8
        %s252 = scalar_lea.vmem [#allocation5], %s251
        // Predicated region
        $region33: #{tpu_custom_call.1} parent=27 // pred_check
          %p253 = pneg %p91
        $region34: #{tpu_custom_call.1} parent=27 // pred_check_branch
          %255 = sbr.rel (%p253) target = $region36
        $region35: #{tpu_custom_call.1} parent=27 // pred_region
          %257 = dma.done %s249, 128
        $region36: #{tpu_custom_call.1} parent=27 // pred_fallthru
          _
        %s258 = sand.u32 %s50, 1
        %s259 = scalar_lea.sflag [#allocation3], %s258
        %s260 = sand.u32 %s50, 1
        %s261 = smul.addr %s260, 32
        %s262 = scalar_lea.vmem [#allocation2], %s261
        %p263 = pneg %p63
        %p264 = pneg %p60
        %s265 = sand.u32 %s78, 1
        %s266 = scalar_lea.sflag [#allocation6], %s265
        %s267 = sand.u32 %s78, 1
        %s268 = smul.addr %s267, 8
        %s269 = scalar_lea.vmem [#allocation5], %s268
        %p270 = pneg %p91
        %p271 = pneg %p88
        %p272 = pneg %p117
        %p273 = pneg %p114
        %s274 = sand.u32 %s104, 1
        %s275 = scalar_lea.sflag [#allocation4], %s274
        %s276 = sand.u32 %s104, 1
        %s277 = smul.addr %s276, 32
        %s278 = scalar_lea.vmem [#allocation7], %s277
        %p279 = pneg %p143
        %p280 = pneg %p140
        %s281 = sand.u32 %s28, 1
        %s282 = scalar_lea.sflag [#allocation9], %s281
        %s283 = sand.u32 %s130, 1
        %s284 = smul.addr %s283, 32
        %s285 = scalar_lea.vmem [#allocation8], %s284
        %p286 = pneg %p169
        %p287 = pneg %p166
        %s288 = sand.u32 %s28, 1
        %s289 = scalar_lea.sflag [#allocation9], %s288
        %s290 = sand.u32 %s156, 1
        %s291 = smul.addr %s290, 8
        %s292 = scalar_lea.vmem [#allocation10], %s291
        %v293 = vld [vmem:[%s242] sm:$0xff]
        %v294 = vld [vmem:[%s242 + $0x8] sm:$0xff]
        %v295 = vld [vmem:[%s242 + $0x10] sm:$0xff]
        %v296 = vld [vmem:[%s242 + $0x18] sm:$0xff]
        %v297 = vld [vmem:[%s252] sm:$0xff]
        %vm298 = vcmp.eq.s32.totalorder %v297, 0
        %vm299 = vcmp.eq.s32.totalorder %v297, 1
        %vm300 = vcmp.eq.s32.totalorder %v297, 2
        %vm301 = vcmp.eq.s32.totalorder %v297, 3
        %v302 = vsel %vm298, 1, 0
        %v303 = vsel %vm299, 1, 0
        %v304 = vsel %vm300, 1, 0
        %v305 = vsel %vm301, 1, 0
        %v306 = vcvt.s32.f32 %v302
        %v307 = vcvt.s32.f32 %v303
        %v308 = vcvt.s32.f32 %v304
        %v309 = vcvt.s32.f32 %v305
        %vm310 = vcmp.ge.s32.totalorder %v297, 0
        %v311 = vsel %vm310, 1, 0
        %v312 = vcvt.s32.f32 %v311
        %v313 = vmax.f32 %v293, %v294
        %v314 = vmax.f32 %v295, %v296
        %v315 = vmax.f32 %v313, %v314
        %v316 = vsub.f32 %v293, %v315
        %v317 = vsub.f32 %v294, %v315
        %v318 = vsub.f32 %v295, %v315
        %v319 = vsub.f32 %v296, %v315
        %v320 = vmul.f32 %v316, 1.442695
        %v321 = vpow.pop %v320
        %v322 = vmul.f32 %v317, 1.442695
        %v323 = vpow.pop %v322
        %v324 = vmul.f32 %v318, 1.442695
        %v325 = vpow.pop %v324
        %v326 = vmul.f32 %v319, 1.442695
        %v327 = vpow.pop %v326
        %v328 = vadd.f32 %v321, %v323
        %v329 = vadd.f32 %v328, %v325
        %v330 = vadd.f32 %v329, %v327
        %v331 = vrcp.pop %v330
        %v332 = vmul.f32 %v330, %v331
        %v333 = vsub.f32 1.0, %v332
        %v334 = vmul.f32 %v331, %v333
        %v335 = vadd.f32 %v331, %v334
        %vm336 = vweird.f32 %v330
        %vm337 = vweird.f32 %v331
        %vm338 = vmor %vm336, %vm337
        %v339 = vsel %vm338, %v331, %v335
        %v340 = vand.u32 2147483647, %v330
        %vm341 = vcmp.eq.f32.partialorder %v340, 8.507059e+37
        %v342 = vand.u32 %v330, 2147483648
        %v343 = vor.u32 1.1754944e-38, %v342
        %v344 = vsel %vm341, %v343, %v339
        %v345 = vmul.f32 %v321, %v344
        %v346 = vmul.f32 %v323, %v344
        %v347 = vmul.f32 %v325, %v344
        %v348 = vmul.f32 %v327, %v344
        %v349 = vlog2.pop %v330
        %v350 = vmul.f32 %v349, 0.6931472
        %v351 = vadd.f32 %v350, %v315
        %v352 = vmul.f32 %v345, %v306
        %v353 = vmul.f32 %v346, %v307
        %v354 = vmul.f32 %v347, %v308
        %v355 = vmul.f32 %v348, %v309
        %v356 = vmul.f32 %v293, %v306
        %v357 = vmul.f32 %v294, %v307
        %v358 = vmul.f32 %v295, %v308
        %v359 = vmul.f32 %v296, %v309
        %v360 = vadd.f32 %v356, %v357
        %v361 = vadd.f32 %v360, %v358
        %v362 = vadd.f32 %v361, %v359
        %v363 = vsub.f32 %v351, %v362
        %v364 = vadd.f32 %v352, %v353
        %v365 = vadd.f32 %v364, %v354
        %v366 = vadd.f32 %v365, %v355
        %v367 = vsub.f32 1.0, %v366
        %v368 = vmax.f32 %v367, 0.0
        %v369 = vmul.f32 %v368, %v368
        %v370 = vmul.f32 %v369, %v363
        %v371 = vmul.f32 %v370, %v312
        %v372 = vmul.f32 %v345, %v345
        %v373 = vmul.f32 %v346, %v346
        %v374 = vmul.f32 %v347, %v347
        %v375 = vmul.f32 %v348, %v348
        %v376 = vmul.f32 %v372, %v312
        %v377 = vmul.f32 %v373, %v312
        %v378 = vmul.f32 %v374, %v312
        %v379 = vmul.f32 %v375, %v312
        %v380 = vadd.f32 %v376, %v306
        %v381 = vadd.f32 %v377, %v307
        %v382 = vadd.f32 %v378, %v308
        %v383 = vadd.f32 %v379, %v309
        %p384 = scmp.eq.s32.totalorder %s33, 0
        // Predicated region
        $region37: #{tpu_custom_call.1} parent=27 // pred_check
          %p385 = pneg %p384
        $region38: #{tpu_custom_call.1} parent=27 // pred_check_branch
          %387 = sbr.rel (%p385) target = $region40
        $region39: #{tpu_custom_call.1} parent=27 // pred_region
          %388 = vst [vmem:[%s278] sm:$0xff] 0.0
          %389 = vst [vmem:[%s278 + $0x8] sm:$0xff] 0.0
          %390 = vst [vmem:[%s278 + $0x10] sm:$0xff] 0.0
          %391 = vst [vmem:[%s278 + $0x18] sm:$0xff] 0.0
          %392 = vst [vmem:[%s285] sm:$0xff] 0.0
          %393 = vst [vmem:[%s285 + $0x8] sm:$0xff] 0.0
          %394 = vst [vmem:[%s285 + $0x10] sm:$0xff] 0.0
          %395 = vst [vmem:[%s285 + $0x18] sm:$0xff] 0.0
          %396 = vst [vmem:[%s292] sm:$0xff] 0.0
        $region40: #{tpu_custom_call.1} parent=27 // pred_fallthru
          _
        %v397 = vld [vmem:[%s278] sm:$0xff]
        %v398 = vld [vmem:[%s278 + $0x8] sm:$0xff]
        %v399 = vld [vmem:[%s278 + $0x10] sm:$0xff]
        %v400 = vld [vmem:[%s278 + $0x18] sm:$0xff]
        %v401 = vadd.f32 %v397, %v352
        %v402 = vadd.f32 %v398, %v353
        %v403 = vadd.f32 %v399, %v354
        %v404 = vadd.f32 %v400, %v355
        %405 = vst [vmem:[%s278] sm:$0xff] %v401
        %406 = vst [vmem:[%s278 + $0x8] sm:$0xff] %v402
        %407 = vst [vmem:[%s278 + $0x10] sm:$0xff] %v403
        %408 = vst [vmem:[%s278 + $0x18] sm:$0xff] %v404
        %v409 = vld [vmem:[%s285] sm:$0xff]
        %v410 = vld [vmem:[%s285 + $0x8] sm:$0xff]
        %v411 = vld [vmem:[%s285 + $0x10] sm:$0xff]
        %v412 = vld [vmem:[%s285 + $0x18] sm:$0xff]
        %v413 = vadd.f32 %v409, %v380
        %v414 = vadd.f32 %v410, %v381
        %v415 = vadd.f32 %v411, %v382
        %v416 = vadd.f32 %v412, %v383
        %417 = vst [vmem:[%s285] sm:$0xff] %v413
        %418 = vst [vmem:[%s285 + $0x8] sm:$0xff] %v414
        %419 = vst [vmem:[%s285 + $0x10] sm:$0xff] %v415
        %420 = vst [vmem:[%s285 + $0x18] sm:$0xff] %v416
        %v421 = vld [vmem:[%s292] sm:$0xff]
        %v422 = vadd.f32 %v421, %v371
        %423 = vst [vmem:[%s292] sm:$0xff] %v422
        %s424 = sand.u32 %s104, 1
        %s425 = scalar_lea.sflag [#allocation4], %s424
        %s426 = sand.u32 %s104, 1
        %s427 = smul.addr %s426, 32
        %s428 = scalar_lea.vmem [#allocation7], %s427
        %s429 = sand.u32 %s28, 1
        %s430 = scalar_lea.sflag [#allocation9], %s429
        %s431 = sand.u32 %s130, 1
        %s432 = smul.addr %s431, 32
        %s433 = scalar_lea.vmem [#allocation8], %s432
        %s434 = sand.u32 %s28, 1
        %s435 = scalar_lea.sflag [#allocation9], %s434
        %s436 = sand.u32 %s156, 1
        %s437 = smul.addr %s436, 8
        %s438 = scalar_lea.vmem [#allocation10], %s437
        // Predicated region
        $region41: #{tpu_custom_call.1} parent=27 // pred_check
          %p439 = pneg %p114
        $region42: #{tpu_custom_call.1} parent=27 // pred_check_branch
          %441 = sbr.rel (%p439) target = $region44
        $region43: #{tpu_custom_call.1} parent=27 // pred_region
          %443 = vsyncadd %s425, 0
          %s444 = smul.addr %s32, 4
          %s445 = smul.addr %s444, 8
          %s446 = scalar_lea.hbm %s2, %s445
          %s447 = sshll.u32 %s428, 4
          %s448 = int_to_ptr.vmem [resolvable:$true] %s447
          %s449 = sshll.u32 %s446, 4
          %s450 = int_to_ptr.hbm [resolvable:$true] %s449
          %455 = dma.vmem_to_hbm [thread:$0]  %s448, 512, %s450, %s425, 128, 128, 8
        $region44: #{tpu_custom_call.1} parent=27 // pred_fallthru
          _
        // Predicated region
        $region45: #{tpu_custom_call.1} parent=27 // pred_check
          %p456 = pneg %p140
        $region46: #{tpu_custom_call.1} parent=27 // pred_check_branch
          %458 = sbr.rel (%p456) target = $region48
        $region47: #{tpu_custom_call.1} parent=27 // pred_region
          %460 = vsyncadd %s430, 0
          %s461 = smul.addr %s32, 4
          %s462 = smul.addr %s461, 8
          %s463 = scalar_lea.hbm %s3, %s462
          %s464 = sshll.u32 %s433, 4
          %s465 = int_to_ptr.vmem [resolvable:$true] %s464
          %s466 = sshll.u32 %s463, 4
          %s467 = int_to_ptr.hbm [resolvable:$true] %s466
          %472 = dma.vmem_to_hbm [thread:$0]  %s465, 512, %s467, %s430, 128, 128, 8
        $region48: #{tpu_custom_call.1} parent=27 // pred_fallthru
          _
        // Predicated region
        $region49: #{tpu_custom_call.1} parent=27 // pred_check
          %p473 = pneg %p166
        $region50: #{tpu_custom_call.1} parent=27 // pred_check_branch
          %475 = sbr.rel (%p473) target = $region52
        $region51: #{tpu_custom_call.1} parent=27 // pred_region
          %477 = vsyncadd %s435, 0
          %s478 = smul.addr %s32, 8
          %s479 = scalar_lea.hbm %s4, %s478
          %s481 = sshll.u32 %s438, 4
          %s482 = int_to_ptr.vmem [resolvable:$true] %s481
          %s483 = sshll.u32 %s479, 4
          %s484 = int_to_ptr.hbm [resolvable:$true] %s483
          %486 = dma.vmem_to_hbm [thread:$0]  %s482, 128, %s484, %s435
        $region52: #{tpu_custom_call.1} parent=27 // pred_fallthru
          _
      $region28: #{tpu_custom_call.1} parent=5 // pred_fallthru
        _
      %p487 = scmp.le.s32.totalorder 2, %s23
      // Predicated region
      $region53: #{tpu_custom_call.1} parent=5 // pred_check
        %p488 = pneg %p487
      $region54: #{tpu_custom_call.1} parent=5 // pred_check_branch
        %490 = sbr.rel (%p488) target = $region56
      $region55: #{tpu_custom_call.1} parent=5 // pred_region
        %s491 = ssub.s32 %s23, 2
        // Predicated region
        $region57: #{tpu_custom_call.1} parent=55 // pred_check
          %p492 = pneg %p120
        $region58: #{tpu_custom_call.1} parent=55 // pred_check_branch
          %494 = sbr.rel (%p492) target = $region60
        $region59: #{tpu_custom_call.1} parent=55 // pred_region
          %s495 = sand.u32 %s105, 1
          %s496 = scalar_lea.sflag [#allocation4], %s495
          %s497 = sand.u32 %s105, 1
          %s498 = smul.addr %s497, 32
          %s499 = scalar_lea.vmem [#allocation7], %s498
          %501 = dma.done %s496, 512
        $region60: #{tpu_custom_call.1} parent=55 // pred_fallthru
          _
        // Predicated region
        $region61: #{tpu_custom_call.1} parent=55 // pred_check
          %p502 = pneg %p146
        $region62: #{tpu_custom_call.1} parent=55 // pred_check_branch
          %504 = sbr.rel (%p502) target = $region64
        $region63: #{tpu_custom_call.1} parent=55 // pred_region
          %s505 = sand.u32 %s29, 1
          %s506 = scalar_lea.sflag [#allocation9], %s505
          %s507 = sand.u32 %s131, 1
          %s508 = smul.addr %s507, 32
          %s509 = scalar_lea.vmem [#allocation8], %s508
          %511 = dma.done %s506, 512
        $region64: #{tpu_custom_call.1} parent=55 // pred_fallthru
          _
        // Predicated region
        $region65: #{tpu_custom_call.1} parent=55 // pred_check
          %p512 = pneg %p172
        $region66: #{tpu_custom_call.1} parent=55 // pred_check_branch
          %514 = sbr.rel (%p512) target = $region68
        $region67: #{tpu_custom_call.1} parent=55 // pred_region
          %s515 = sand.u32 %s29, 1
          %s516 = scalar_lea.sflag [#allocation9], %s515
          %s517 = sand.u32 %s157, 1
          %s518 = smul.addr %s517, 8
          %s519 = scalar_lea.vmem [#allocation10], %s518
          %521 = dma.done %s516, 128
        $region68: #{tpu_custom_call.1} parent=55 // pred_fallthru
          _
      $region56: #{tpu_custom_call.1} parent=5 // pred_fallthru
        _
    $region6: #{tpu_custom_call.1} parent=1 // loop_footer
      %s27 = sadd.s32 1, %s23
    $region7: #{tpu_custom_call.1} parent=1 // loop_footer_branch
      %22 = sbr.rel target = $region3
    $region8: #{tpu_custom_call.1} parent=1 // loop_exit
      _
    %522 = vsyncpa [#allocation3], 1
    %s523 = scalar_lea.sflag [#allocation3], 1
    %524 = vsyncpa %s523, 1
    %525 = vsyncpa [#allocation6], 1
    %s526 = scalar_lea.sflag [#allocation6], 1
    %527 = vsyncpa %s526, 1
    %528 = vsyncpa [#allocation4], 1
    %s529 = scalar_lea.sflag [#allocation4], 1
    %530 = vsyncpa %s529, 1
    %531 = vsyncpa [#allocation9], 1
    %s532 = scalar_lea.sflag [#allocation9], 1
    %533 = vsyncpa %s532, 1

</llo_original>
